<compile_context>
chip_gen: v5e
topology: v5e:2x2
jax: 0.10.0
libtpu: 0.0.40
codegen_flags: <defaults>
</compile_context>

<pallas_src>
import jax
import jax.numpy as jnp
from jax.experimental import pallas as pl
from jax.experimental.pallas import tpu as pltpu


def _round_up(x, m):
    return (x + m - 1) // m * m


def _patch_embed_kernel(x_ref, w_ref, b_ref, o_ref):
    # x_ref: (TM, Kp) patch tile; w_ref: (Kp, Ep) resident; b_ref: (1, Ep) f32.
    acc = jnp.dot(x_ref[...], w_ref[...], preferred_element_type=jnp.float32)
    o_ref[...] = (acc + b_ref[...]).astype(o_ref.dtype)


def _choose_tile_m(M, k_pad, e_pad, in_itemsize, out_itemsize,
                   vmem_budget_bytes=24 * 1024 * 1024):
    """Largest MXU/VMEM-friendly row tile that fits the budget (v7x-safe)."""
    m8 = _round_up(M, 8)
    weight_bytes = 2 * k_pad * e_pad * in_itemsize               # resident (2x conservative)
    per_row = 2 * (k_pad * in_itemsize + e_pad * out_itemsize)   # dbl-buffered in + out
    avail = max(vmem_budget_bytes - weight_bytes, 8 * per_row)
    tm = int(avail // per_row)
    tm = max(8, min(tm, 1024, m8))
    if tm >= 256:
        tm -= tm % 256      # MXU-friendly
    else:
        tm -= tm % 8        # sublane-aligned
    return tm, weight_bytes, per_row


def patch_embedding(x, weight, bias, patch_size, compute_dtype=jnp.bfloat16):
    """x: (B, C, H, W); weight: (E, C, P, P) (Conv2d layout); bias: (E,)."""
    B, C, H, W = x.shape
    E = weight.shape[0]
    P = patch_size
    assert H % P == 0 and W % P == 0
    nh, nw = H // P, W // P
    N = nh * nw
    M = B * N
    K = C * P * P
    out_dtype = x.dtype

    # --- glue: extract non-overlapping patches, flatten in (C, kh, kw) order
    # (matches nn.Conv2d's (E, C, P, P) weight flattening) ---
    # TODO(synk): this reshape/transpose is a standalone XLA op (extra HBM round
    # trip of the activation); folding the per-tile permute into the kernel via a
    # 6-D BlockSpec would remove it.
    xp = x.reshape(B, C, nh, P, nw, P)
    xp = jnp.transpose(xp, (0, 2, 4, 1, 3, 5))
    xp = xp.reshape(M, K)

    w = weight.reshape(E, K).T                   # (K, E)
    b = bias.reshape(1, E).astype(jnp.float32)

    # --- pad K and E up to multiples of 128 (lane-dense MXU / store path) ---
    k_pad = _round_up(K, 128)
    e_pad = _round_up(E, 128)

    xp = xp.astype(compute_dtype)
    w = w.astype(compute_dtype)
    if k_pad != K:
        xp = jnp.pad(xp, ((0, 0), (0, k_pad - K)))
        w = jnp.pad(w, ((0, k_pad - K), (0, 0)))
    if e_pad != E:
        w = jnp.pad(w, ((0, 0), (0, e_pad - E)))
        b = jnp.pad(b, ((0, 0), (0, e_pad - E)))

    in_itemsize = jnp.dtype(compute_dtype).itemsize
    out_itemsize = jnp.dtype(out_dtype).itemsize
    tm, weight_bytes, per_row = _choose_tile_m(
        M, k_pad, e_pad, in_itemsize, out_itemsize)

    # Pad M so the grid divides evenly (tail tile handled by zero rows).
    m_pad = _round_up(M, tm)
    if m_pad != M:
        xp = jnp.pad(xp, ((0, m_pad - M), (0, 0)))

    footprint = weight_bytes + tm * per_row + 2 * e_pad * 4
    vmem_limit = min(max(int(footprint * 1.5) + (4 << 20), 16 << 20), 40 << 20)

    out = pl.pallas_call(
        _patch_embed_kernel,
        out_shape=jax.ShapeDtypeStruct((m_pad, e_pad), out_dtype),
        grid=(m_pad // tm,),
        in_specs=[
            pl.BlockSpec((tm, k_pad), lambda i: (i, 0)),     # patch tiles (pipelined)
            pl.BlockSpec((k_pad, e_pad), lambda i: (0, 0)),  # weight: VMEM-resident
            pl.BlockSpec((1, e_pad), lambda i: (0, 0)),      # bias: VMEM-resident
        ],
        out_specs=pl.BlockSpec((tm, e_pad), lambda i: (i, 0)),
        compiler_params=pltpu.CompilerParams(
            dimension_semantics=("parallel",),   # megacore split on v7x, no-op on v5e/v6e
            vmem_limit_bytes=vmem_limit,
        ),
    )(xp, w, b)

    # Strip padding, (B*N, E) -> (B, N, E)  == conv(x).flatten(2).transpose(1, 2)
    return out[:M, :E].reshape(B, N, E)


def _reference(x, weight, bias, patch_size):
    """Pure-JAX (f32) reference mirroring the PyTorch forward."""
    y = jax.lax.conv_general_dilated(
        x, weight,
        window_strides=(patch_size, patch_size),
        padding="VALID",
        dimension_numbers=("NCHW", "OIHW", "NCHW"),
    ) + bias.reshape(1, -1, 1, 1)
    B, E, hh, ww = y.shape
    return jnp.transpose(y.reshape(B, E, hh * ww), (0, 2, 1))


if __name__ == "__main__":
    # Small shapes consistent with the module: B=2, C=4, H=W=16, P=4, E=32
    B, C, H, W = 2, 4, 16, 16
    P, E = 4, 32

    key = jax.random.PRNGKey(0)
    kx, kw, kb = jax.random.split(key, 3)

    x = jax.random.normal(kx, (B, C, H, W), dtype=jnp.float32)
    # Synthetic parameters for nn.Conv2d(in_channels=C, out_channels=E, k=P, s=P)
    weight = jax.random.normal(kw, (E, C, P, P), dtype=jnp.float32) * 0.05
    bias = jax.random.normal(kb, (E,), dtype=jnp.float32) * 0.05

    fn = jax.jit(patch_embedding, static_argnames=("patch_size", "compute_dtype"))
    ref = _reference(x, weight, bias, P)

    # f32 compute path: exact module semantics.
    out_f32 = jax.block_until_ready(
        fn(x, weight, bias, patch_size=P, compute_dtype=jnp.float32))
    assert out_f32.shape == (B, (H // P) * (W // P), E), out_f32.shape
    assert jnp.allclose(out_f32, ref, atol=1e-4, rtol=1e-4), "f32 mismatch vs reference"

    # bf16 compute path (default MXU fast path): looser tolerance.
    out_bf16 = jax.block_until_ready(fn(x, weight, bias, patch_size=P))
    assert out_bf16.shape == (B, (H // P) * (W // P), E), out_bf16.shape
    assert jnp.allclose(out_bf16, ref, atol=5e-2, rtol=5e-2), "bf16 mismatch vs reference"

    print("KERNEL_OK")
</pallas_src>

<mosaic_0001>
module attributes {stable_mosaic.version = 11 : i64} {
  func.func @_patch_embed_kernel(%arg0: i32, %arg1: memref<32x128xf32, #tpu.memory_space<vmem>>, %arg2: memref<128x128xf32, #tpu.memory_space<vmem>>, %arg3: memref<1x128xf32, #tpu.memory_space<vmem>>, %arg4: memref<32x128xf32, #tpu.memory_space<vmem>>) attributes {dimension_semantics = [#tpu.dimension_semantics<parallel>], iteration_bounds = array<i64: 1>, scalar_prefetch = 0 : i64, scratch_operands = 0 : i64, tpu.core_type = #tpu.core_type<tc>, window_params = [{transform_indices = @transform_0, window_bounds = array<i64: 32, 128>}, {pipeline_mode = #tpu.pipeline_mode<synchronous>, transform_indices = @transform_1, window_bounds = array<i64: 128, 128>}, {pipeline_mode = #tpu.pipeline_mode<synchronous>, transform_indices = @transform_2, window_bounds = array<i64: 1, 128>}, {transform_indices = @transform_3, window_bounds = array<i64: 32, 128>}]} {
    %c0 = arith.constant 0 : index
    %c0_0 = arith.constant 0 : index
    %0 = vector.load %arg1[%c0, %c0_0] : memref<32x128xf32, #tpu.memory_space<vmem>>, vector<32x128xf32>
    %c0_1 = arith.constant 0 : index
    %c0_2 = arith.constant 0 : index
    %1 = vector.load %arg2[%c0_1, %c0_2] : memref<128x128xf32, #tpu.memory_space<vmem>>, vector<128x128xf32>
    %cst = arith.constant dense<0.000000e+00> : vector<32x128xf32>
    %2 = tpu.matmul %0, %1, %cst {dimension_numbers = #tpu.dot_dimension_numbers<[1], [0], [0], [1], [0, 0, 1, 1], [], []>} : vector<32x128xf32>, vector<128x128xf32>, vector<32x128xf32> -> vector<32x128xf32>
    %c0_3 = arith.constant 0 : index
    %c0_4 = arith.constant 0 : index
    %3 = vector.load %arg3[%c0_3, %c0_4] : memref<1x128xf32, #tpu.memory_space<vmem>>, vector<1x128xf32>
    %4 = vector.broadcast %3 : vector<1x128xf32> to vector<32x128xf32>
    %5 = arith.addf %2, %4 : vector<32x128xf32>
    %c0_5 = arith.constant 0 : index
    %c0_6 = arith.constant 0 : index
    %6 = vector.load %arg4[%c0_5, %c0_6] : memref<32x128xf32, #tpu.memory_space<vmem>>, vector<32x128xf32>
    tpu.vector_store %arg4[%c0_5, %c0_6], %5 {strides = array<i32>} : memref<32x128xf32, #tpu.memory_space<vmem>>, vector<32x128xf32>,
    return
  }
  func.func @transform_0(%arg0: i32) -> (i32, i32) {
    %c0_i32 = arith.constant 0 : i32
    %c0_i32_0 = arith.constant 0 : i32
    return %arg0, %c0_i32 : i32, i32
  }
  func.func @transform_1(%arg0: i32) -> (i32, i32) {
    %c0_i32 = arith.constant 0 : i32
    %c0_i32_0 = arith.constant 0 : i32
    %c0_i32_1 = arith.constant 0 : i32
    return %c0_i32, %c0_i32_0 : i32, i32
  }
  func.func @transform_2(%arg0: i32) -> (i32, i32) {
    %c0_i32 = arith.constant 0 : i32
    %c0_i32_0 = arith.constant 0 : i32
    %c0_i32_1 = arith.constant 0 : i32
    return %c0_i32, %c0_i32_0 : i32, i32
  }
  func.func @transform_3(%arg0: i32) -> (i32, i32) {
    %c0_i32 = arith.constant 0 : i32
    %c0_i32_0 = arith.constant 0 : i32
    return %arg0, %c0_i32 : i32, i32
  }
}

</mosaic_0001>

<llo_original>
// kernel: patch_embedding.1
$region0: #{patch_embedding.1}
  #allocation0 [shape = 'u32[]', space=smem, size = 0x4, offset = 0x4, fixed_abs, tag = 'smem constant byte address 0x4 - core index']
  #allocation1 [shape = 'u32[72,128]{1,0:T(1,128)}', space=vmem, size = 0x9000, scoped, tag = 'internal scratch']
  %s0 = inlined_call_operand.vmem [shape: f32[32,128], index: 0, kind: input, shape index: {}]
  %s1 = inlined_call_operand.vmem [shape: f32[128,128], index: 1, kind: input, shape index: {}]
  %s2 = inlined_call_operand.vmem [shape: f32[1,128], index: 2, kind: input, shape index: {}]
  %s3 = inlined_call_operand.hbm [shape: f32[32,128], index: 3, kind: output, shape index: {}]
  %s4 = sld [smem:[#allocation0]]
  $region22: #{patch_embedding.1} parent=0
    _
  %s6 = ssub.s32 1, %s4
  %s7 = scalar_select 0, %s6, %s4
  $region1: #{patch_embedding.1} parent=0
    #allocation2 [shape = 'u8[16384]{0}', space=vmem, size = 0x4000, scoped, tag = 'output window, operand 0, single buffered']
    #allocation3 [shape = 's32[1]{0}', space=sflag, size = 0x4, scoped, tag = 'scoped memory for patch_embedding.1']
    %8 = vsyncpa [#allocation3], 0
    // Predicated region
    $region2: #{patch_embedding.1} parent=1 // pred_check
      _
    $region3: #{patch_embedding.1} parent=1 // pred_check_branch
      %10 = sbr.rel (0) target = $region5
    $region4: #{patch_embedding.1} parent=1 // pred_region
      _
    $region5: #{patch_embedding.1} parent=1 // pred_fallthru
      _
    // Predicated region
    $region6: #{patch_embedding.1} parent=1 // pred_check
      _
    $region7: #{patch_embedding.1} parent=1 // pred_check_branch
      %12 = sbr.rel (0) target = $region9
    $region8: #{patch_embedding.1} parent=1 // pred_region
      _
    $region9: #{patch_embedding.1} parent=1 // pred_fallthru
      _
    // Predicated region
    $region10: #{patch_embedding.1} parent=1 // pred_check
      _
    $region11: #{patch_embedding.1} parent=1 // pred_check_branch
      %14 = sbr.rel (0) target = $region13
    $region12: #{patch_embedding.1} parent=1 // pred_region
      _
    $region13: #{patch_embedding.1} parent=1 // pred_fallthru
      _
    %v15 = vld [vmem:[%s0] sm:$0xff]
    %v16 = vld [vmem:[%s0 + $0x8] sm:$0xff]
    %v17 = vld [vmem:[%s0 + $0x10] sm:$0xff]
    %v18 = vld [vmem:[%s0 + $0x18] sm:$0xff]
    %v19 = vld [vmem:[%s1] sm:$0xff]
    %v20 = vld [vmem:[%s1 + $0x8] sm:$0xff]
    %v21 = vld [vmem:[%s1 + $0x10] sm:$0xff]
    %v22 = vld [vmem:[%s1 + $0x18] sm:$0xff]
    %v23 = vld [vmem:[%s1 + $0x20] sm:$0xff]
    %v24 = vld [vmem:[%s1 + $0x28] sm:$0xff]
    %v25 = vld [vmem:[%s1 + $0x30] sm:$0xff]
    %v26 = vld [vmem:[%s1 + $0x38] sm:$0xff]
    %v27 = vld [vmem:[%s1 + $0x40] sm:$0xff]
    %v28 = vld [vmem:[%s1 + $0x48] sm:$0xff]
    %v29 = vld [vmem:[%s1 + $0x50] sm:$0xff]
    %v30 = vld [vmem:[%s1 + $0x58] sm:$0xff]
    %v31 = vld [vmem:[%s1 + $0x60] sm:$0xff]
    %v32 = vld [vmem:[%s1 + $0x68] sm:$0xff]
    %v33 = vld [vmem:[%s1 + $0x70] sm:$0xff]
    %v34 = vld [vmem:[%s1 + $0x78] sm:$0xff]
    %v35 = vld [vmem:[%s2] sm:$0x1]
    %v37 = vperm.slane %v35, 0
    %39 = vmatpush.msra.mxu0 %v34
    %40 = vmatpush.msra.mxu0 %v33
    %41 = vmatpush.msra.mxu0 %v32
    %42 = vmatpush.msra.mxu0 %v31
    %43 = vmatpush.msra.mxu0 %v30
    %44 = vmatpush.msra.mxu0 %v29
    %45 = vmatpush.msra.mxu0 %v28
    %46 = vmatpush.msra.mxu0 %v27
    %47 = vmatpush.msra.mxu0 %v26
    %48 = vmatpush.msra.mxu0 %v25
    %49 = vmatpush.msra.mxu0 %v24
    %50 = vmatpush.msra.mxu0 %v23
    %51 = vmatpush.msra.mxu0 %v22
    %52 = vmatpush.msra.mxu0 %v21
    %53 = vmatpush.msra.mxu0 %v20
    %54 = vmatpush.msra.mxu0 %v19
    %55 = vmatmul.f32.gmra.mxu0 %v15
    %v56 = vpop.f32.mrf.mxu0
    %v57 = vadd.f32 %v37, %v56
    %58 = vmatmul.f32.gmra.mxu0 %v16
    %v59 = vpop.f32.mrf.mxu0
    %v60 = vadd.f32 %v37, %v59
    %61 = vmatmul.f32.gmra.mxu0 %v17
    %v62 = vpop.f32.mrf.mxu0
    %v63 = vadd.f32 %v37, %v62
    %64 = vmatmul.f32.gmra.mxu0 %v18
    %v65 = vpop.f32.mrf.mxu0
    %v66 = vadd.f32 %v37, %v65
    %67 = vdwg.mxu0
    %68 = vst [vmem:[#allocation2] sm:$0xff] %v57
    %69 = vst [vmem:[#allocation2 + $0x8] sm:$0xff] %v60
    %70 = vst [vmem:[#allocation2 + $0x10] sm:$0xff] %v63
    %71 = vst [vmem:[#allocation2 + $0x18] sm:$0xff] %v66
    // Predicated region
    $region14: #{patch_embedding.1} parent=1 // pred_check
      _
    $region15: #{patch_embedding.1} parent=1 // pred_check_branch
      %73 = sbr.rel (0) target = $region17
    $region16: #{patch_embedding.1} parent=1 // pred_region
      %75 = vsyncadd [#allocation3], 0
      %s76 = sshll.u32 [#allocation2], 4
      %s77 = int_to_ptr.vmem [resolvable:$true] %s76
      %s78 = sshll.u32 %s3, 4
      %s79 = int_to_ptr.hbm [resolvable:$true] %s78
      %84 = dma.vmem_to_hbm [thread:$0]  %s77, 512, %s79, [#allocation3], 128, 128, 8
    $region17: #{patch_embedding.1} parent=1 // pred_fallthru
      _
    // Predicated region
    $region18: #{patch_embedding.1} parent=1 // pred_check
      _
    $region19: #{patch_embedding.1} parent=1 // pred_check_branch
      %86 = sbr.rel (0) target = $region21
    $region20: #{patch_embedding.1} parent=1 // pred_region
      %88 = dma.done [#allocation3], 512
    $region21: #{patch_embedding.1} parent=1 // pred_fallthru
      _
    %89 = vsyncpa [#allocation3], 1

</llo_original>
